<compile_context>
chip_gen: v5e
topology: v5e:2x2
jax: 0.10.0
libtpu: 0.0.40
codegen_flags: <defaults>
</compile_context>

<pallas_src>
import jax
import jax.numpy as jnp
from jax.experimental import pallas as pl
from jax.experimental.pallas import tpu as pltpu


def _round_up(x, m):
    return ((x + m - 1) // m) * m


def _logreg_kernel(params_ref, x_ref, o_ref):
    # params_ref: SMEM (3,) f32 = [w0, w1, b]
    # x_ref:      VMEM (2, TR, L)  -- two dense feature planes, batch on
    #                                 sublanes (rows) and lanes (cols)
    # o_ref:      VMEM (TR, L)     -- dense 8x128-tiled output slab
    w0 = params_ref[0]
    w1 = params_ref[1]
    b = params_ref[2]

    z = x_ref[0] * w0 + x_ref[1] * w1 + b          # (TR, L), pure VPU
    # sigmoid via a single EUP transcendental (exact, overflow-safe).
    o_ref[...] = (0.5 * jnp.tanh(0.5 * z) + 0.5).astype(o_ref.dtype)


def _choose_layout(n, *, lane_width=512, max_rows_per_step=512):
    """Pick (rows_pad, L, TR) so blocks are dense (8,128)-tiled and ~3 MiB."""
    L = lane_width                                  # multiple of 128
    rows_total = -(-max(n, 1) // L)                 # ceil(n / L)
    rows_pad = _round_up(rows_total, 8)
    if rows_pad <= max_rows_per_step:
        if rows_pad >= 16:
            # Split into (at least) 2 grid steps so both v7x cores get work.
            rows_pad = _round_up(rows_pad, 16)
            tr = rows_pad // 2
        else:
            tr = rows_pad
    else:
        rows_pad = _round_up(rows_pad, max_rows_per_step)
        tr = max_rows_per_step
    return rows_pad, L, tr


@jax.jit
def logistic_regression_forward(x, weight, bias):
    """x: (N, 2) f32, weight: (1, 2) f32, bias: (1,) f32 -> (N, 1) f32."""
    n = x.shape[0]
    rows_pad, L, tr = _choose_layout(n)
    n_pad = rows_pad * L

    # Pack W and b into one tiny SMEM scalar vector [w0, w1, b].
    params = jnp.concatenate(
        [weight.reshape(-1), bias.reshape(-1)]).astype(jnp.float32)

    # Dense feature planes: x_planes[f, r, c] = feature f of batch element
    # r*L + c, zero-padded past N.  (Fuses under jit with the caller.)
    # TODO(synk): longer term, consume the interleaved (N, 2) layout directly
    # in-kernel (even/odd lane combine via pltpu.roll) to drop this repack.
    xf = x.astype(jnp.float32)
    x_planes = (
        jnp.zeros((2, n_pad), jnp.float32)
        .at[:, :n].set(xf.T)
        .reshape(2, rows_pad, L)
    )

    grid = (rows_pad // tr,)
    out = pl.pallas_call(
        _logreg_kernel,
        out_shape=jax.ShapeDtypeStruct((rows_pad, L), jnp.float32),
        grid=grid,
        in_specs=[
            # Whole (3,) params vector in SMEM, shared by every grid step.
            pl.BlockSpec(memory_space=pltpu.MemorySpace.SMEM),
            # Both feature planes, one row-tile per step: (2, TR, L).
            pl.BlockSpec((2, tr, L), lambda i: (0, i, 0)),
        ],
        out_specs=pl.BlockSpec((tr, L), lambda i: (i, 0)),
        compiler_params=pltpu.CompilerParams(
            dimension_semantics=("parallel",),
        ),
    )(params, x_planes)

    # Back to the PyTorch-compatible (N, 1) layout (padding lanes hold
    # sigmoid(b) garbage and are sliced off here).
    return out.reshape(-1)[:n].reshape(n, 1)


if __name__ == "__main__":
    key = jax.random.PRNGKey(0)
    kx, kw, kb, kx2 = jax.random.split(key, 4)

    # Same shapes as torch.nn.Linear(2, 1); PyTorch init range U(-1/sqrt(2), 1/sqrt(2)).
    bound = 1.0 / jnp.sqrt(2.0)
    weight = jax.random.uniform(kw, (1, 2), jnp.float32, -bound, bound)
    bias = jax.random.uniform(kb, (1,), jnp.float32, -bound, bound)

    # Small example input: batch=8, in_features=2.
    x = jax.random.normal(kx, (8, 2), jnp.float32)
    y = jax.block_until_ready(logistic_regression_forward(x, weight, bias))
    y_ref = jax.nn.sigmoid(x @ weight.T + bias)
    assert y.shape == (8, 1)
    assert jnp.allclose(y, y_ref, atol=1e-6), "mismatch vs reference (small)"

    # Secondary check exercising the multi-step (pipelined, 2-core) path.
    x2 = jax.random.normal(kx2, (10_000, 2), jnp.float32)
    y2 = jax.block_until_ready(logistic_regression_forward(x2, weight, bias))
    y2_ref = jax.nn.sigmoid(x2 @ weight.T + bias)
    assert y2.shape == (10_000, 1)
    assert jnp.allclose(y2, y2_ref, atol=1e-6), "mismatch vs reference (large)"

    print("KERNEL_OK")
</pallas_src>

<mosaic_0001>
module attributes {stable_mosaic.version = 11 : i64} {
  func.func @_logreg_kernel(%arg0: i32, %arg1: memref<3xf32, #tpu.memory_space<smem>>, %arg2: memref<2x8x512xf32, #tpu.memory_space<vmem>>, %arg3: memref<8x512xf32, #tpu.memory_space<vmem>>) attributes {dimension_semantics = [#tpu.dimension_semantics<parallel>], iteration_bounds = array<i64: 1>, scalar_prefetch = 0 : i64, scratch_operands = 0 : i64, tpu.core_type = #tpu.core_type<tc>, window_params = [{transform_indices = @transform_0, window_bounds = array<i64: 3>}, {transform_indices = @transform_1, window_bounds = array<i64: 2, 8, 512>}, {transform_indices = @transform_2, window_bounds = array<i64: 8, 512>}]} {
    %c0 = arith.constant 0 : index
    %0 = memref.load %arg1[%c0] : memref<3xf32, #tpu.memory_space<smem>>
    %c1 = arith.constant 1 : index
    %1 = memref.load %arg1[%c1] : memref<3xf32, #tpu.memory_space<smem>>
    %c2 = arith.constant 2 : index
    %2 = memref.load %arg1[%c2] : memref<3xf32, #tpu.memory_space<smem>>
    %c0_0 = arith.constant 0 : index
    %c0_1 = arith.constant 0 : index
    %c0_2 = arith.constant 0 : index
    %3 = vector.load %arg2[%c0_0, %c0_1, %c0_2] : memref<2x8x512xf32, #tpu.memory_space<vmem>>, vector<1x8x512xf32>
    %4 = vector.shape_cast %3 : vector<1x8x512xf32> to vector<8x512xf32>
    %5 = vector.broadcast %0 : f32 to vector<8x512xf32>
    %6 = arith.mulf %4, %5 : vector<8x512xf32>
    %c1_3 = arith.constant 1 : index
    %c0_4 = arith.constant 0 : index
    %c0_5 = arith.constant 0 : index
    %7 = vector.load %arg2[%c1_3, %c0_4, %c0_5] : memref<2x8x512xf32, #tpu.memory_space<vmem>>, vector<1x8x512xf32>
    %8 = vector.shape_cast %7 : vector<1x8x512xf32> to vector<8x512xf32>
    %9 = vector.broadcast %1 : f32 to vector<8x512xf32>
    %10 = arith.mulf %8, %9 : vector<8x512xf32>
    %11 = arith.addf %6, %10 : vector<8x512xf32>
    %12 = vector.broadcast %2 : f32 to vector<8x512xf32>
    %13 = arith.addf %11, %12 : vector<8x512xf32>
    %cst = arith.constant 5.000000e-01 : f32
    %14 = vector.broadcast %cst : f32 to vector<8x512xf32>
    %15 = arith.mulf %14, %13 : vector<8x512xf32>
    %16 = math.tanh %15 : vector<8x512xf32>
    %cst_6 = arith.constant 5.000000e-01 : f32
    %17 = vector.broadcast %cst_6 : f32 to vector<8x512xf32>
    %18 = arith.mulf %17, %16 : vector<8x512xf32>
    %cst_7 = arith.constant 5.000000e-01 : f32
    %19 = vector.broadcast %cst_7 : f32 to vector<8x512xf32>
    %20 = arith.addf %18, %19 : vector<8x512xf32>
    %c0_8 = arith.constant 0 : index
    %c0_9 = arith.constant 0 : index
    %21 = vector.load %arg3[%c0_8, %c0_9] : memref<8x512xf32, #tpu.memory_space<vmem>>, vector<8x512xf32>
    tpu.vector_store %arg3[%c0_8, %c0_9], %20 {strides = array<i32>} : memref<8x512xf32, #tpu.memory_space<vmem>>, vector<8x512xf32>,
    return
  }
  func.func @transform_0(%arg0: i32) -> i32 {
    %c0_i32 = arith.constant 0 : i32
    %c0_i32_0 = arith.constant 0 : i32
    return %c0_i32 : i32
  }
  func.func @transform_1(%arg0: i32) -> (i32, i32, i32) {
    %c0_i32 = arith.constant 0 : i32
    %c0_i32_0 = arith.constant 0 : i32
    %c0_i32_1 = arith.constant 0 : i32
    return %c0_i32, %arg0, %c0_i32_0 : i32, i32, i32
  }
  func.func @transform_2(%arg0: i32) -> (i32, i32) {
    %c0_i32 = arith.constant 0 : i32
    %c0_i32_0 = arith.constant 0 : i32
    return %arg0, %c0_i32 : i32, i32
  }
}

</mosaic_0001>

<llo_original>
// kernel: logistic_regression_forward.1
$region0: #{logistic_regression_forward.1}
  #allocation0 [shape = 'u32[]', space=smem, size = 0x4, offset = 0x4, fixed_abs, tag = 'smem constant byte address 0x4 - core index']
  #allocation1 [shape = 'u32[72,128]{1,0:T(1,128)}', space=vmem, size = 0x9000, scoped, tag = 'internal scratch']
  %s0 = inlined_call_operand.vmem [shape: f32[3], index: 0, kind: input, shape index: {}]
  %s1 = inlined_call_operand.vmem [shape: f32[2,8,512], index: 1, kind: input, shape index: {}]
  %s2 = inlined_call_operand.vmem [shape: f32[8,512], index: 2, kind: output, shape index: {}]
  %s3 = sld [smem:[#allocation0]]
  $region22: #{logistic_regression_forward.1} parent=0
    _
  %s5 = ssub.s32 1, %s3
  %s6 = scalar_select 0, %s5, %s3
  $region1: #{logistic_regression_forward.1} parent=0
    #allocation2 [shape = 'u8[512]{0}', space=smem, size = 0x200, scoped, tag = 'input window, operand 0, single buffered']
    #allocation3 [shape = 's32[1]{0}', space=sflag, size = 0x4, scoped, tag = 'scoped memory for logistic_regression_forward.1']
    %7 = vsyncpa [#allocation3], 0
    // Predicated region
    $region2: #{logistic_regression_forward.1} parent=1 // pred_check
      _
    $region3: #{logistic_regression_forward.1} parent=1 // pred_check_branch
      %9 = sbr.rel (0) target = $region5
    $region4: #{logistic_regression_forward.1} parent=1 // pred_region
      %11 = vsyncadd [#allocation3], 0
      %s13 = sshll.u32 %s0, 4
      %s14 = int_to_ptr.vmem [resolvable:$true] %s13
      %16 = dma.vmem_to_smem %s14, 16, [#allocation2], [#allocation3]
    $region5: #{logistic_regression_forward.1} parent=1 // pred_fallthru
      _
    // Predicated region
    $region6: #{logistic_regression_forward.1} parent=1 // pred_check
      _
    $region7: #{logistic_regression_forward.1} parent=1 // pred_check_branch
      %18 = sbr.rel (0) target = $region9
    $region8: #{logistic_regression_forward.1} parent=1 // pred_region
      _
    $region9: #{logistic_regression_forward.1} parent=1 // pred_fallthru
      _
    // Predicated region
    $region10: #{logistic_regression_forward.1} parent=1 // pred_check
      _
    $region11: #{logistic_regression_forward.1} parent=1 // pred_check_branch
      %20 = sbr.rel (0) target = $region13
    $region12: #{logistic_regression_forward.1} parent=1 // pred_region
      %22 = dma.done [#allocation3], 16
    $region13: #{logistic_regression_forward.1} parent=1 // pred_fallthru
      _
    %23 = sfence
    %s24 = sld [smem:[#allocation2]]
    %s25 = sld [smem:[#allocation2 + $0x1]]
    %s26 = sld [smem:[#allocation2 + $0x2]]
    %v27 = vld [vmem:[%s1] sm:$0xff]
    %v28 = vld [vmem:[%s1 + $0x8] sm:$0xff]
    %v29 = vld [vmem:[%s1 + $0x10] sm:$0xff]
    %v30 = vld [vmem:[%s1 + $0x18] sm:$0xff]
    %v31 = vstv %s24
    %v32 = vmul.f32 %v27, %v31
    %v33 = vmul.f32 %v28, %v31
    %v34 = vmul.f32 %v29, %v31
    %v35 = vmul.f32 %v30, %v31
    %s36 = scalar_lea.vmem %s1, 32
    %v37 = vld [vmem:[%s36] sm:$0xff]
    %v38 = vld [vmem:[%s36 + $0x8] sm:$0xff]
    %v39 = vld [vmem:[%s36 + $0x10] sm:$0xff]
    %v40 = vld [vmem:[%s36 + $0x18] sm:$0xff]
    %v41 = vstv %s25
    %v42 = vmul.f32 %v37, %v41
    %v43 = vmul.f32 %v38, %v41
    %v44 = vmul.f32 %v39, %v41
    %v45 = vmul.f32 %v40, %v41
    %v46 = vadd.f32 %v32, %v42
    %v47 = vadd.f32 %v33, %v43
    %v48 = vadd.f32 %v34, %v44
    %v49 = vadd.f32 %v35, %v45
    %v50 = vstv %s26
    %v51 = vadd.f32 %v46, %v50
    %v52 = vadd.f32 %v47, %v50
    %v53 = vadd.f32 %v48, %v50
    %v54 = vadd.f32 %v49, %v50
    %v55 = vmul.f32 %v51, 0.5
    %v56 = vmul.f32 %v52, 0.5
    %v57 = vmul.f32 %v53, 0.5
    %v58 = vmul.f32 %v54, 0.5
    %v59 = vtanh.pop %v55
    %v60 = vtanh.pop %v56
    %v61 = vtanh.pop %v57
    %v62 = vtanh.pop %v58
    %v63 = vmul.f32 %v59, 0.5
    %v64 = vmul.f32 %v60, 0.5
    %v65 = vmul.f32 %v61, 0.5
    %v66 = vmul.f32 %v62, 0.5
    %v67 = vadd.f32 %v63, 0.5
    %v68 = vadd.f32 %v64, 0.5
    %v69 = vadd.f32 %v65, 0.5
    %v70 = vadd.f32 %v66, 0.5
    %71 = vst [vmem:[%s2] sm:$0xff] %v67
    %72 = vst [vmem:[%s2 + $0x8] sm:$0xff] %v68
    %73 = vst [vmem:[%s2 + $0x10] sm:$0xff] %v69
    %74 = vst [vmem:[%s2 + $0x18] sm:$0xff] %v70
    // Predicated region
    $region14: #{logistic_regression_forward.1} parent=1 // pred_check
      _
    $region15: #{logistic_regression_forward.1} parent=1 // pred_check_branch
      %76 = sbr.rel (0) target = $region17
    $region16: #{logistic_regression_forward.1} parent=1 // pred_region
      _
    $region17: #{logistic_regression_forward.1} parent=1 // pred_fallthru
      _
    // Predicated region
    $region18: #{logistic_regression_forward.1} parent=1 // pred_check
      _
    $region19: #{logistic_regression_forward.1} parent=1 // pred_check_branch
      %78 = sbr.rel (0) target = $region21
    $region20: #{logistic_regression_forward.1} parent=1 // pred_region
      _
    $region21: #{logistic_regression_forward.1} parent=1 // pred_fallthru
      _
    %79 = vsyncpa [#allocation3], 1

</llo_original>
